<compile_context>
chip_gen: v7x
topology: tpu7x:2x2x1
jax: 0.10.0
libtpu: 0.0.40
codegen_flags: <defaults>
</compile_context>

<pallas_src>
import jax
import jax.numpy as jnp
from jax import lax
from jax.experimental import pallas as pl
from jax.experimental.pallas import tpu as pltpu


def _linear_kernel(x_ref, w_ref, o_ref):
    # x_ref: (tm, K)   w_ref: (tn, K)   o_ref: (tm, tn)
    # Single MXU matmul with a transposed-RHS contraction (no materialized W.T).
    o_ref[...] = lax.dot_general(
        x_ref[...], w_ref[...],
        dimension_numbers=(((1,), (1,)), ((), ())),
        preferred_element_type=jnp.float32,
    ).astype(o_ref.dtype)


def _linear_kernel_acc(x_ref, w_ref, o_ref, acc_ref):
    # Fallback path for very large K: K-tiled grid axis + f32 accumulator.
    k = pl.program_id(2)

    @pl.when(k == 0)
    def _init():
        acc_ref[...] = jnp.zeros_like(acc_ref)

    acc_ref[...] += lax.dot_general(
        x_ref[...], w_ref[...],
        dimension_numbers=(((1,), (1,)), ((), ())),
        preferred_element_type=jnp.float32,
    )

    @pl.when(k == pl.num_programs(2) - 1)
    def _finalize():
        o_ref[...] = acc_ref[...].astype(o_ref.dtype)


def _round_up(x, m):
    return ((x + m - 1) // m) * m


def _vmem_limit_bytes():
    """Generation-aware scoped-VMEM limit with a conservative fallback."""
    cap = None
    try:
        info = pltpu.get_tpu_info()
        cap = getattr(info, "vmem_capacity_bytes", None)
    except Exception:
        cap = None
    if not cap:
        cap = 64 * 1024 * 1024  # conservative: v7x per-TensorCore physical
    # ~3/4 of physical, capped at 96 MiB (128 MiB parts) and floored at 32 MiB.
    return int(max(32 * 1024 * 1024, min(cap * 3 // 4, 96 * 1024 * 1024)))


def output_linear(X, W, *, compute_dtype=None, tm_pref=512):
    """Pallas implementation of OutputLinear.forward.

    X: (n_step, batch, input_size)
    W: (output_size, input_size)   -- nn.Linear weight (no bias)
    returns: (batch, n_step, output_size)
    """
    S, B, K = X.shape
    N, Kw = W.shape
    assert Kw == K
    out_dtype = X.dtype

    if compute_dtype is not None:
        X = X.astype(compute_dtype)
        W = W.astype(compute_dtype)
    in_item = jnp.dtype(X.dtype).itemsize
    out_item = jnp.dtype(out_dtype).itemsize
    # Packed-sublane alignment for second-to-last block dims (f32:8, bf16:16).
    sub_align = {4: 8, 2: 16, 1: 32}.get(in_item, 8)

    # Fold batch into the matmul M axis, batch-major, so the kernel's 2-D
    # output reshapes for free into (batch, n_step, out).  Transposing X
    # (size M*K) is cheaper than transposing the (M*N) output when N >= K,
    # which is the typical output-projection case.
    M = B * S
    Xf = jnp.swapaxes(X, 0, 1).reshape(M, K)

    vmem_limit = _vmem_limit_bytes()
    budget = (vmem_limit * 7) // 10          # target footprint for all tiles

    # --- output-feature tile: always a 128-multiple (lane-dense stores).
    Np = _round_up(N, 128)
    tn = 256 if (Np >= 256 and Np % 256 == 0) else 128

    # --- contraction: keep K resident when the double-buffered W tile fits
    #     comfortably; otherwise tile K with an accumulator.
    k_grid = (2 * tn * K * in_item) > (budget // 3)
    if k_grid:
        tk = 512 if K >= 512 else _round_up(K, 128)
        Kp = _round_up(K, tk)
    else:
        tk = K
        Kp = K

    # --- M tile from the remaining budget: 2x X tile + 2x W tile + 2x out
    #     tile (+ f32 accumulator if K is tiled).
    per_row = 2 * tk * in_item + 2 * tn * out_item + (4 * tn if k_grid else 0)
    avail = budget - 2 * tn * tk * in_item
    tm_max = max(sub_align, (avail // per_row) // sub_align * sub_align)
    tm = max(sub_align, min(tm_pref, tm_max, _round_up(M, sub_align)))
    Mp = _round_up(M, tm)

    # Zero-pad operands so every tile is full-size; padded K columns multiply
    # against zeros and padded M/N rows/cols are sliced off the result.
    if Mp != M or Kp != K:
        Xf = jnp.pad(Xf, ((0, Mp - M), (0, Kp - K)))
    if Np != N or Kp != K:
        W = jnp.pad(W, ((0, Np - N), (0, Kp - K)))

    cost = pl.CostEstimate(
        flops=2 * M * K * N,
        transcendentals=0,
        bytes_accessed=int(
            Mp * Kp * in_item * ((Np // tn) if k_grid else 1)   # X streams
            + Np * Kp * in_item * (Mp // tm)                    # W streams
            + Mp * Np * out_item                                # output
        ),
    )

    if k_grid:
        grid = (Mp // tm, Np // tn, Kp // tk)
        in_specs = [
            pl.BlockSpec((tm, tk), lambda m, n, k: (m, k)),
            pl.BlockSpec((tn, tk), lambda m, n, k: (n, k)),
        ]
        out_specs = pl.BlockSpec((tm, tn), lambda m, n, k: (m, n))
        scratch = [pltpu.VMEM((tm, tn), jnp.float32)]
        dims = ("parallel", "parallel", "arbitrary")
        kernel = _linear_kernel_acc
    else:
        grid = (Mp // tm, Np // tn)
        in_specs = [
            pl.BlockSpec((tm, Kp), lambda m, n: (m, 0)),
            pl.BlockSpec((tn, Kp), lambda m, n: (n, 0)),
        ]
        out_specs = pl.BlockSpec((tm, tn), lambda m, n: (m, n))
        scratch = []
        dims = ("parallel", "parallel")
        kernel = _linear_kernel

    out2d = pl.pallas_call(
        kernel,
        out_shape=jax.ShapeDtypeStruct((Mp, Np), out_dtype),
        grid_spec=pltpu.PrefetchScalarGridSpec(
            num_scalar_prefetch=0,
            grid=grid,
            in_specs=in_specs,
            out_specs=out_specs,
            scratch_shapes=scratch,
        ),
        compiler_params=pltpu.CompilerParams(
            dimension_semantics=dims,
            vmem_limit_bytes=vmem_limit,
        ),
        cost_estimate=cost,
    )(Xf, W)

    # Slice off padding and split the batch-major M axis back into (B, S).
    return out2d[:M, :N].reshape(B, S, N)


if __name__ == "__main__":
    key = jax.random.PRNGKey(0)
    k_x, k_w = jax.random.split(key)

    # Small shapes consistent with the module: (n_step, batch, input_size).
    n_step, batch, input_size, output_size = 8, 2, 32, 16

    X = jax.random.normal(k_x, (n_step, batch, input_size), dtype=jnp.float32)
    # Deterministic init mimicking nn.Linear: U(-1/sqrt(in), 1/sqrt(in)).
    bound = 1.0 / (input_size ** 0.5)
    W = jax.random.uniform(
        k_w, (output_size, input_size), dtype=jnp.float32,
        minval=-bound, maxval=bound,
    )

    out = output_linear(X, W)
    jax.block_until_ready(out)

    # Reference: same semantics as the PyTorch per-step Linear + transpose(0,1).
    ref = jnp.einsum("sbi,oi->bso", X, W)
    assert out.shape == (batch, n_step, output_size)
    assert jnp.allclose(out, ref, atol=1e-5, rtol=1e-5)

    print("KERNEL_OK")
</pallas_src>

<mosaic_0001>
module attributes {stable_mosaic.version = 11 : i64} {
  func.func @_linear_kernel(%arg0: i32, %arg1: i32, %arg2: memref<16x32xf32, #tpu.memory_space<vmem>>, %arg3: memref<128x32xf32, #tpu.memory_space<vmem>>, %arg4: memref<16x128xf32, #tpu.memory_space<vmem>>) attributes {dimension_semantics = [#tpu.dimension_semantics<parallel>, #tpu.dimension_semantics<parallel>], iteration_bounds = array<i64: 1, 1>, scalar_prefetch = 0 : i64, scratch_operands = 0 : i64, tpu.core_type = #tpu.core_type<tc>, window_params = [{transform_indices = @transform_0, window_bounds = array<i64: 16, 32>}, {transform_indices = @transform_1, window_bounds = array<i64: 128, 32>}, {transform_indices = @transform_2, window_bounds = array<i64: 16, 128>}]} {
    %c0 = arith.constant 0 : index
    %c0_0 = arith.constant 0 : index
    %0 = vector.load %arg2[%c0, %c0_0] : memref<16x32xf32, #tpu.memory_space<vmem>>, vector<16x32xf32>
    %c0_1 = arith.constant 0 : index
    %c0_2 = arith.constant 0 : index
    %1 = vector.load %arg3[%c0_1, %c0_2] : memref<128x32xf32, #tpu.memory_space<vmem>>, vector<128x32xf32>
    %cst = arith.constant dense<0.000000e+00> : vector<16x128xf32>
    %2 = tpu.matmul %0, %1, %cst {dimension_numbers = #tpu.dot_dimension_numbers<[1], [1], [0], [0], [0, 0, 1, 0], [], []>} : vector<16x32xf32>, vector<128x32xf32>, vector<16x128xf32> -> vector<16x128xf32>
    %c0_3 = arith.constant 0 : index
    %c0_4 = arith.constant 0 : index
    %3 = vector.load %arg4[%c0_3, %c0_4] : memref<16x128xf32, #tpu.memory_space<vmem>>, vector<16x128xf32>
    tpu.vector_store %arg4[%c0_3, %c0_4], %2 {strides = array<i32>} : memref<16x128xf32, #tpu.memory_space<vmem>>, vector<16x128xf32>,
    return
  }
  func.func @transform_0(%arg0: i32, %arg1: i32) -> (i32, i32) {
    %c0_i32 = arith.constant 0 : i32
    %c0_i32_0 = arith.constant 0 : i32
    return %arg0, %c0_i32 : i32, i32
  }
  func.func @transform_1(%arg0: i32, %arg1: i32) -> (i32, i32) {
    %c0_i32 = arith.constant 0 : i32
    %c0_i32_0 = arith.constant 0 : i32
    return %arg1, %c0_i32 : i32, i32
  }
  func.func @transform_2(%arg0: i32, %arg1: i32) -> (i32, i32) {
    %c0_i32 = arith.constant 0 : i32
    return %arg0, %arg1 : i32, i32
  }
}

</mosaic_0001>

<llo_original>
// kernel: tpu_custom_call.1
$region0: #{tpu_custom_call.1}
  #allocation0 [shape = 'u32[]', space=smem, size = 0x4, offset = 0x4, fixed_abs, tag = 'smem constant byte address 0x4 - core index']
  #allocation1 [shape = 'u32[144,128]{1,0:T(1,128)}', space=vmem, size = 0x12000, scoped, tag = 'internal scratch']
  %s0 = inlined_call_operand.vmem [shape: f32[16,32], index: 0, kind: input, shape index: {}]
  %s1 = inlined_call_operand.vmem [shape: f32[128,32], index: 1, kind: input, shape index: {}]
  %s2 = inlined_call_operand.hbm [shape: f32[16,128], index: 2, kind: output, shape index: {}]
  %s3 = sld [smem:[#allocation0]]
  $region18: #{tpu_custom_call.1} parent=0
    _
  %s5 = ssub.s32 1, %s3
  %s6 = scalar_select 0, %s5, %s3
  $region1: #{tpu_custom_call.1} parent=0
    #allocation2 [shape = 'u8[8192]{0}', space=vmem, size = 0x2000, scoped, tag = 'output window, operand 0, single buffered']
    #allocation3 [shape = 's32[1]{0}', space=sflag, size = 0x4, scoped, tag = 'scoped memory for tpu_custom_call.1']
    %7 = vsyncpa [#allocation3], 0
    // Predicated region
    $region2: #{tpu_custom_call.1} parent=1 // pred_check
      _
    $region3: #{tpu_custom_call.1} parent=1 // pred_check_branch
      %9 = sbr.rel (0) target = $region5
    $region4: #{tpu_custom_call.1} parent=1 // pred_region
      _
    $region5: #{tpu_custom_call.1} parent=1 // pred_fallthru
      _
    // Predicated region
    $region6: #{tpu_custom_call.1} parent=1 // pred_check
      _
    $region7: #{tpu_custom_call.1} parent=1 // pred_check_branch
      %11 = sbr.rel (0) target = $region9
    $region8: #{tpu_custom_call.1} parent=1 // pred_region
      _
    $region9: #{tpu_custom_call.1} parent=1 // pred_fallthru
      _
    %v12 = vld [vmem:[%s0] sm:$0xff]
    %v13 = vld [vmem:[%s0 + $0x8] sm:$0xff]
    %v14 = vld [vmem:[%s1] sm:$0xff]
    %v15 = vld [vmem:[%s1 + $0x8] sm:$0xff]
    %v16 = vld [vmem:[%s1 + $0x10] sm:$0xff]
    %v17 = vld [vmem:[%s1 + $0x18] sm:$0xff]
    %v18 = vld [vmem:[%s1 + $0x20] sm:$0xff]
    %v19 = vld [vmem:[%s1 + $0x28] sm:$0xff]
    %v20 = vld [vmem:[%s1 + $0x30] sm:$0xff]
    %v21 = vld [vmem:[%s1 + $0x38] sm:$0xff]
    %v22 = vld [vmem:[%s1 + $0x40] sm:$0xff]
    %v23 = vld [vmem:[%s1 + $0x48] sm:$0xff]
    %v24 = vld [vmem:[%s1 + $0x50] sm:$0xff]
    %v25 = vld [vmem:[%s1 + $0x58] sm:$0xff]
    %v26 = vld [vmem:[%s1 + $0x60] sm:$0xff]
    %v27 = vld [vmem:[%s1 + $0x68] sm:$0xff]
    %v28 = vld [vmem:[%s1 + $0x70] sm:$0xff]
    %v29 = vld [vmem:[%s1 + $0x78] sm:$0xff]
    %vm30 = vcmask 261120
    %v32 = vsel %vm30, %v12, 0
    %v35 = vsel %vm30, %v13, 0
    %v38 = vsel %vm30, %v14, 0
    %v41 = vsel %vm30, %v15, 0
    %v44 = vsel %vm30, %v16, 0
    %v47 = vsel %vm30, %v17, 0
    %v50 = vsel %vm30, %v18, 0
    %v53 = vsel %vm30, %v19, 0
    %v56 = vsel %vm30, %v20, 0
    %v59 = vsel %vm30, %v21, 0
    %v62 = vsel %vm30, %v22, 0
    %v65 = vsel %vm30, %v23, 0
    %v68 = vsel %vm30, %v24, 0
    %v71 = vsel %vm30, %v25, 0
    %v74 = vsel %vm30, %v26, 0
    %v77 = vsel %vm30, %v27, 0
    %v80 = vsel %vm30, %v28, 0
    %v83 = vsel %vm30, %v29, 0
    %85 = vmatprep.subr.mxu0 0.0
    %86 = vmatpush1.xpose.msra.mxu0 %v38
    %87 = vmatprep.subr.mxu0 0.0
    %88 = vmatpush1.xpose.msra.mxu0 %v41
    %89 = vmatprep.subr.mxu0 0.0
    %90 = vmatpush1.xpose.msra.mxu0 %v44
    %91 = vmatprep.subr.mxu0 0.0
    %92 = vmatpush1.xpose.msra.mxu0 %v47
    %93 = vmatprep.subr.mxu0 0.0
    %94 = vmatpush1.xpose.msra.mxu0 %v50
    %95 = vmatprep.subr.mxu0 0.0
    %96 = vmatpush1.xpose.msra.mxu0 %v53
    %97 = vmatprep.subr.mxu0 0.0
    %98 = vmatpush1.xpose.msra.mxu0 %v56
    %99 = vmatprep.subr.mxu0 0.0
    %100 = vmatpush1.xpose.msra.mxu0 %v59
    %101 = vmatprep.subr.mxu0 0.0
    %102 = vmatpush1.xpose.msra.mxu0 %v62
    %103 = vmatprep.subr.mxu0 0.0
    %104 = vmatpush1.xpose.msra.mxu0 %v65
    %105 = vmatprep.subr.mxu0 0.0
    %106 = vmatpush1.xpose.msra.mxu0 %v68
    %107 = vmatprep.subr.mxu0 0.0
    %108 = vmatpush1.xpose.msra.mxu0 %v71
    %109 = vmatprep.subr.mxu0 0.0
    %110 = vmatpush1.xpose.msra.mxu0 %v74
    %111 = vmatprep.subr.mxu0 0.0
    %112 = vmatpush1.xpose.msra.mxu0 %v77
    %113 = vmatprep.subr.mxu0 0.0
    %114 = vmatpush1.xpose.msra.mxu0 %v80
    %115 = vmatprep.subr.mxu0 0.0
    %116 = vmatpush1.xpose.msra.mxu0 %v83
    %117 = vmatprep.subr.mxu0 0.0
    %118 = vmatpush1.xpose.msra.mxu0 0.0
    %119 = vmatprep.subr.mxu0 0.0
    %120 = vmatpush1.xpose.msra.mxu0 0.0
    %121 = vmatprep.subr.mxu0 0.0
    %122 = vmatpush1.xpose.msra.mxu0 0.0
    %123 = vmatprep.subr.mxu0 0.0
    %124 = vmatpush1.xpose.msra.mxu0 0.0
    %125 = vmatprep.subr.mxu0 0.0
    %126 = vmatpush1.xpose.msra.mxu0 0.0
    %127 = vmatprep.subr.mxu0 0.0
    %128 = vmatpush1.xpose.msra.mxu0 0.0
    %129 = vmatprep.subr.mxu0 0.0
    %130 = vmatpush1.xpose.msra.mxu0 0.0
    %131 = vmatprep.subr.mxu0 0.0
    %132 = vmatpush1.xpose.msra.mxu0 0.0
    %133 = vmatprep.subr.mxu0 0.0
    %134 = vmatpush1.xpose.msra.mxu0 0.0
    %135 = vmatprep.subr.mxu0 0.0
    %136 = vmatpush1.xpose.msra.mxu0 0.0
    %137 = vmatprep.subr.mxu0 0.0
    %138 = vmatpush1.xpose.msra.mxu0 0.0
    %139 = vmatprep.subr.mxu0 0.0
    %140 = vmatpush1.xpose.msra.mxu0 0.0
    %141 = vmatprep.subr.mxu0 0.0
    %142 = vmatpush1.xpose.msra.mxu0 0.0
    %143 = vmatprep.subr.mxu0 0.0
    %144 = vmatpush1.xpose.msra.mxu0 0.0
    %145 = vmatprep.subr.mxu0 0.0
    %146 = vmatpush1.xpose.msra.mxu0 0.0
    %147 = vmatprep.subr.mxu0 0.0
    %148 = vmatpush1.xpose.msra.mxu0 0.0
    %149 = vmatprep.mubr.f32.mxu0 0.0
    %150 = vmatmul.mubr.f32.gmra.mrb[0].mxu0 %v32
    %v151 = vpop.f32.mrb[0].mxu0
    %v152 = vadd.f32 0.0, %v151
    %v153 = vpop.f32.mrb[0].mxu0
    %154 = vmatprep.mubr.f32.mxu0 0.0
    %155 = vmatmul.mubr.f32.gmra.mrb[0].mxu0 %v35
    %v156 = vpop.f32.mrb[0].mxu0
    %v157 = vadd.f32 0.0, %v156
    %v158 = vpop.f32.mrb[0].mxu0
    %159 = vdwg.mxu0
    %160 = vst [vmem:[#allocation2] sm:$0xff] %v152
    %161 = vst [vmem:[#allocation2 + $0x8] sm:$0xff] %v157
    // Predicated region
    $region10: #{tpu_custom_call.1} parent=1 // pred_check
      _
    $region11: #{tpu_custom_call.1} parent=1 // pred_check_branch
      %163 = sbr.rel (0) target = $region13
    $region12: #{tpu_custom_call.1} parent=1 // pred_region
      %s165 = ssub.s32 256, 256
      %166 = vsyncadd [#allocation3], %s165
      %s167 = sshll.u32 [#allocation2], 4
      %s168 = int_to_ptr.vmem [resolvable:$true] %s167
      %173 = dma.vmem_to_hbm [thread:$0]  %s168, 256, %s2, [#allocation3], 128, 128, 8
    $region13: #{tpu_custom_call.1} parent=1 // pred_fallthru
      _
    // Predicated region
    $region14: #{tpu_custom_call.1} parent=1 // pred_check
      _
    $region15: #{tpu_custom_call.1} parent=1 // pred_check_branch
      %175 = sbr.rel (0) target = $region17
    $region16: #{tpu_custom_call.1} parent=1 // pred_region
      %176 = dma.done [#allocation3], 256
    $region17: #{tpu_custom_call.1} parent=1 // pred_fallthru
      _
    %177 = vsyncpa [#allocation3], 1

</llo_original>
